<compile_context>
chip_gen: v5e
topology: v5e:2x2
jax: 0.10.0
libtpu: 0.0.40
codegen_flags: <defaults>
</compile_context>

<pallas_src>
import math
import functools

import jax
import jax.numpy as jnp
from jax.experimental import pallas as pl
from jax.experimental.pallas import tpu as pltpu

BN_EPS = 1e-5
_MB = 1024 * 1024


def _round_up(x, m):
    return ((x + m - 1) // m) * m


# ---------------------------------------------------------------------------
# Kernel 1: person/temporal mean pooling   (N, M*T, J*C) -> (N, J*C) bf16
#   grid = (row tiles [parallel], MT tiles [arbitrary, reduction])
# ---------------------------------------------------------------------------
def _pool_kernel(inv_mt, x_ref, o_ref, acc_ref):
    m = pl.program_id(1)

    @pl.when(m == 0)
    def _():
        acc_ref[...] = jnp.zeros_like(acc_ref)

    # Sum this MT chunk into the resident f32 accumulator.
    acc_ref[...] += jnp.sum(x_ref[...], axis=1)

    @pl.when(m == pl.num_programs(1) - 1)
    def _():
        # Single bf16 cast for the whole pipeline (MLP consumes bf16 directly).
        o_ref[...] = (acc_ref[...] * inv_mt).astype(o_ref.dtype)


def mean_pool_pallas(x, *, out_dtype=jnp.bfloat16, block_bytes=4 * _MB):
    """x: (N, MT, D) f32 -> (N, D) out_dtype (mean over axis 1)."""
    N, MT, D = x.shape

    tn = min(N, 8)                       # leading dim: no (8,128) constraint
    Np = _round_up(N, tn)

    # MT chunk sized so the (tn, tmt, D) f32 input block stays ~block_bytes
    # (re-derives automatically for v7x-sized D, demo D=128 just takes all MT).
    tmt = max(8, (block_bytes // max(1, tn * D * 4)) // 8 * 8)
    tmt = min(tmt, _round_up(MT, 8))
    MTp = _round_up(MT, tmt)

    if (Np, MTp) != (N, MT):
        # Zero padding is exact: zeros don't change the sum, divide by true MT.
        x = jnp.pad(x, ((0, Np - N), (0, MTp - MT), (0, 0)))

    vmem_bytes = (2 * tn * tmt * D * 4          # double-buffered input chunk
                  + 2 * tn * D * jnp.dtype(out_dtype).itemsize
                  + tn * D * 4)                 # f32 accumulator scratch
    vmem_limit = int(min(64 * _MB, vmem_bytes + 16 * _MB))

    kernel = functools.partial(_pool_kernel, 1.0 / MT)
    out = pl.pallas_call(
        kernel,
        out_shape=jax.ShapeDtypeStruct((Np, D), out_dtype),
        grid=(Np // tn, MTp // tmt),
        in_specs=[pl.BlockSpec((tn, tmt, D), lambda i, m: (i, m, 0))],
        out_specs=pl.BlockSpec((tn, D), lambda i, m: (i, 0)),
        scratch_shapes=[pltpu.VMEM((tn, D), jnp.float32)],
        compiler_params=pltpu.CompilerParams(
            dimension_semantics=("parallel", "arbitrary"),
            vmem_limit_bytes=vmem_limit),
    )(x)
    return out[:N]


# ---------------------------------------------------------------------------
# Kernel 2: fused fc1(+folded BN) + ReLU + fc2, tiled over the hidden dim
#   grid = (row tiles [parallel], hidden tiles [arbitrary, reduction])
# ---------------------------------------------------------------------------
def _mlp_kernel(x_ref, w1_ref, b1_ref, w2_ref, b2_ref, o_ref, acc_ref):
    h = pl.program_id(1)

    @pl.when(h == 0)
    def _():
        acc_ref[...] = jnp.zeros_like(acc_ref)

    # fc1 tile (BN already folded into w1/b1): bf16 operands, f32 accumulation.
    h1 = jnp.dot(x_ref[...], w1_ref[...], preferred_element_type=jnp.float32)
    h1 = jnp.maximum(h1 + b1_ref[...], 0.0)
    # fc2 partial product for this hidden tile, accumulated across h tiles.
    acc_ref[...] += jnp.dot(h1.astype(jnp.bfloat16), w2_ref[...],
                            preferred_element_type=jnp.float32)

    @pl.when(h == pl.num_programs(1) - 1)
    def _():
        o_ref[...] = acc_ref[...] + b2_ref[...]


def fused_mlp_pallas(x, w1, b1, w2, b2):
    """x: (N, D) bf16; w1 (D,H) bf16 / b1 (H,) f32 already BN-folded;
    w2 (H, C) bf16 / b2 (C,) f32 -> logits (N, C) f32."""
    N, D = x.shape
    H = w1.shape[1]
    C = w2.shape[1]

    # Row tile: large to amortize the weight stream; padded, no hard asserts.
    tn = N if N <= 8 else min(256, _round_up(N, 8))
    Np = _round_up(N, tn)

    # Hidden tile (multiple of 128, prefer 512); lane-dense padded class dim.
    Hp = _round_up(H, 128)
    th = 512 if Hp % 512 == 0 else (256 if Hp % 256 == 0 else 128)
    Cp = _round_up(C, 128)

    if Np != N:
        x = jnp.pad(x, ((0, Np - N), (0, 0)))
    if Hp != H:
        w1 = jnp.pad(w1, ((0, 0), (0, Hp - H)))
        b1 = jnp.pad(b1, ((0, Hp - H),))
        w2 = jnp.pad(w2, ((0, Hp - H), (0, 0)))
    if Cp != C:
        w2 = jnp.pad(w2, ((0, 0), (0, Cp - C)))
        b2 = jnp.pad(b2, ((0, Cp - C),))

    b1 = b1.reshape(1, Hp).astype(jnp.float32)
    b2 = b2.reshape(1, Cp).astype(jnp.float32)

    # Actual tile footprint (double-buffered inputs/outputs + scratch),
    # + headroom, capped at 64 MiB so it stays valid on v7x (64 MiB / TC).
    vmem_bytes = (2 * tn * D * 2          # x tile (bf16)
                  + 2 * D * th * 2        # w1 tile (bf16)
                  + 2 * th * Cp * 2       # w2 tile (bf16)
                  + 2 * (th + Cp) * 4     # b1 / b2 tiles
                  + tn * Cp * 4           # acc scratch
                  + 2 * tn * Cp * 4)      # output tile
    vmem_limit = int(min(64 * _MB, vmem_bytes + 16 * _MB))

    out = pl.pallas_call(
        _mlp_kernel,
        out_shape=jax.ShapeDtypeStruct((Np, Cp), jnp.float32),
        grid=(Np // tn, Hp // th),
        in_specs=[
            pl.BlockSpec((tn, D), lambda i, h: (i, 0)),    # pooled feats (bf16)
            pl.BlockSpec((D, th), lambda i, h: (0, h)),    # folded w1 tile
            pl.BlockSpec((1, th), lambda i, h: (0, h)),    # folded b1 tile
            pl.BlockSpec((th, Cp), lambda i, h: (h, 0)),   # w2 tile
            pl.BlockSpec((1, Cp), lambda i, h: (0, 0)),    # b2
        ],
        out_specs=pl.BlockSpec((tn, Cp), lambda i, h: (i, 0)),
        scratch_shapes=[pltpu.VMEM((tn, Cp), jnp.float32)],
        compiler_params=pltpu.CompilerParams(
            dimension_semantics=("parallel", "arbitrary"),
            vmem_limit_bytes=vmem_limit),
    )(x, w1, b1, w2, b2)
    return out[:N, :C]


# ---------------------------------------------------------------------------
# Host-side prep: fold BatchNorm(eval) + fc1 bias into fc1, pre-cast to bf16.
# Done ONCE (not per forward) so no per-call f32->bf16 weight traffic.
# ---------------------------------------------------------------------------
def fold_params(params):
    scale = params["bn_g"] * jax.lax.rsqrt(params["bn_var"] + BN_EPS)     # (H,)
    w1_f = (params["w1"] * scale[None, :]).astype(jnp.bfloat16)
    b1_f = ((params["b1"] - params["bn_mean"]) * scale
            + params["bn_b"]).astype(jnp.float32)
    return {
        "w1": w1_f,
        "b1": b1_f,
        "w2": params["w2"].astype(jnp.bfloat16),
        "b2": params["b2"].astype(jnp.float32),
    }


# ---------------------------------------------------------------------------
# Forward (glue is only free metadata reshapes)
# ---------------------------------------------------------------------------
def action_head_forward(folded, feat):
    """feat: (N, M, T, J, C) f32 -> logits (N, num_classes) f32."""
    N, M, T, J, C = feat.shape
    # dropout(p) is identity at inference.
    # permute(0,1,3,4,2).mean(-1).reshape(N,M,-1).mean(1) == mean over (M, T)
    # with the same (j*C + c) feature flatten order -> free reshape + one pool.
    x = feat.reshape(N, M * T, J * C)
    pooled = mean_pool_pallas(x)                           # (N, J*C) bf16
    return fused_mlp_pallas(pooled, folded["w1"], folded["b1"],
                            folded["w2"], folded["b2"])


# ---------------------------------------------------------------------------
# Deterministic parameter init (shapes from ActionHeadClassification.__init__)
# ---------------------------------------------------------------------------
def init_params(key, dim_rep, num_joints, hidden_dim, num_classes):
    k1, k2 = jax.random.split(key)

    def lin(k, fin, fout):
        kw, kb = jax.random.split(k)
        bound = 1.0 / math.sqrt(fin)
        w = jax.random.uniform(kw, (fin, fout), jnp.float32, -bound, bound)
        b = jax.random.uniform(kb, (fout,), jnp.float32, -bound, bound)
        return w, b

    d_in = dim_rep * num_joints
    p = {}
    p["w1"], p["b1"] = lin(k1, d_in, hidden_dim)
    p["w2"], p["b2"] = lin(k2, hidden_dim, num_classes)
    p["bn_g"] = jnp.ones((hidden_dim,), jnp.float32)
    p["bn_b"] = jnp.zeros((hidden_dim,), jnp.float32)
    p["bn_mean"] = jnp.zeros((hidden_dim,), jnp.float32)
    p["bn_var"] = jnp.ones((hidden_dim,), jnp.float32)
    return p


# ---------------------------------------------------------------------------
if __name__ == "__main__":
    # Small shapes consistent with the module:
    #   N=2 clips, M=2 persons, T=8 frames, J=4 joints, C=dim_rep=32
    #   -> flattened feature J*C = 128, hidden_dim=256, num_classes=16
    N, M, T, J, C = 2, 2, 8, 4, 32
    hidden_dim, num_classes = 256, 16

    key = jax.random.PRNGKey(0)
    kp, kf = jax.random.split(key)
    params = init_params(kp, C, J, hidden_dim, num_classes)
    folded = fold_params(params)                       # one-time BN fold + bf16
    feat = jax.random.normal(kf, (N, M, T, J, C), jnp.float32)

    out = action_head_forward(folded, feat)
    out = jax.block_until_ready(out)

    assert out.shape == (N, num_classes), out.shape
    assert bool(jnp.all(jnp.isfinite(out)))

    # Sanity check against a pure-JAX f32 reference (bf16 matmul tolerance).
    pooled_ref = feat.reshape(N, M * T, J * C).mean(axis=1)
    scale = params["bn_g"] * jax.lax.rsqrt(params["bn_var"] + BN_EPS)
    h_ref = jnp.maximum(
        (pooled_ref @ params["w1"] + params["b1"] - params["bn_mean"]) * scale
        + params["bn_b"], 0.0)
    ref = h_ref @ params["w2"] + params["b2"]
    assert bool(jnp.allclose(out, ref, atol=5e-2, rtol=5e-2)), \
        float(jnp.max(jnp.abs(out - ref)))

    print("KERNEL_OK")
</pallas_src>

<mosaic_0001>
module attributes {stable_mosaic.version = 11 : i64} {
  func.func @_pool_kernel(%arg0: i32, %arg1: i32, %arg2: memref<2x16x128xf32, #tpu.memory_space<vmem>>, %arg3: memref<2x128xbf16, #tpu.memory_space<vmem>>, %arg4: memref<2x128xf32, #tpu.memory_space<vmem>>) attributes {dimension_semantics = [#tpu.dimension_semantics<parallel>, #tpu.dimension_semantics<arbitrary>], iteration_bounds = array<i64: 1, 1>, scalar_prefetch = 0 : i64, scratch_operands = 1 : i64, tpu.core_type = #tpu.core_type<tc>, window_params = [{transform_indices = @transform_0, window_bounds = array<i64: 2, 16, 128>}, {transform_indices = @transform_1, window_bounds = array<i64: 2, 128>}]} {
    %c0_i32 = arith.constant 0 : i32
    %0 = arith.cmpi eq, %arg1, %c0_i32 : i32
    %1 = arith.extui %0 : i1 to i32
    %c0_i32_0 = arith.constant 0 : i32
    %2 = arith.cmpi ne, %1, %c0_i32_0 : i32
    scf.if %2 {
      %cst_9 = arith.constant 0.000000e+00 : f32
      %11 = vector.broadcast %cst_9 : f32 to vector<2x128xf32>
      %c0_10 = arith.constant 0 : index
      %c0_11 = arith.constant 0 : index
      %12 = vector.load %arg4[%c0_10, %c0_11] : memref<2x128xf32, #tpu.memory_space<vmem>>, vector<2x128xf32>
      tpu.vector_store %arg4[%c0_10, %c0_11], %11 {strides = array<i32>} : memref<2x128xf32, #tpu.memory_space<vmem>>, vector<2x128xf32>,
    } else {
    }
    %c0 = arith.constant 0 : index
    %c0_1 = arith.constant 0 : index
    %3 = vector.load %arg4[%c0, %c0_1] : memref<2x128xf32, #tpu.memory_space<vmem>>, vector<2x128xf32>
    %c0_2 = arith.constant 0 : index
    %c0_3 = arith.constant 0 : index
    %c0_4 = arith.constant 0 : index
    %4 = vector.load %arg2[%c0_2, %c0_3, %c0_4] : memref<2x16x128xf32, #tpu.memory_space<vmem>>, vector<2x16x128xf32>
    %cst = arith.constant dense<0.000000e+00> : vector<2x128xf32>
    %5 = vector.multi_reduction <add>, %4, %cst [1] : vector<2x16x128xf32> to vector<2x128xf32>
    %6 = arith.addf %3, %5 : vector<2x128xf32>
    %c0_5 = arith.constant 0 : index
    %c0_6 = arith.constant 0 : index
    %7 = vector.load %arg4[%c0_5, %c0_6] : memref<2x128xf32, #tpu.memory_space<vmem>>, vector<2x128xf32>
    tpu.vector_store %arg4[%c0_5, %c0_6], %6 {strides = array<i32>} : memref<2x128xf32, #tpu.memory_space<vmem>>, vector<2x128xf32>,
    %c0_i32_7 = arith.constant 0 : i32
    %8 = arith.cmpi eq, %arg1, %c0_i32_7 : i32
    %9 = arith.extui %8 : i1 to i32
    %c0_i32_8 = arith.constant 0 : i32
    %10 = arith.cmpi ne, %9, %c0_i32_8 : i32
    scf.if %10 {
      %c0_9 = arith.constant 0 : index
      %c0_10 = arith.constant 0 : index
      %11 = vector.load %arg4[%c0_9, %c0_10] : memref<2x128xf32, #tpu.memory_space<vmem>>, vector<2x128xf32>
      %cst_11 = arith.constant 6.250000e-02 : f32
      %12 = vector.broadcast %cst_11 : f32 to vector<2x128xf32>
      %13 = arith.mulf %11, %12 : vector<2x128xf32>
      %14 = arith.truncf %13 : vector<2x128xf32> to vector<2x128xbf16>
      %c0_12 = arith.constant 0 : index
      %c0_13 = arith.constant 0 : index
      %15 = vector.load %arg3[%c0_12, %c0_13] : memref<2x128xbf16, #tpu.memory_space<vmem>>, vector<2x128xbf16>
      tpu.vector_store %arg3[%c0_12, %c0_13], %14 {strides = array<i32>} : memref<2x128xbf16, #tpu.memory_space<vmem>>, vector<2x128xbf16>,
    } else {
    }
    return
  }
  func.func @transform_0(%arg0: i32, %arg1: i32) -> (i32, i32, i32) {
    %c0_i32 = arith.constant 0 : i32
    %c0_i32_0 = arith.constant 0 : i32
    return %arg0, %arg1, %c0_i32 : i32, i32, i32
  }
  func.func @transform_1(%arg0: i32, %arg1: i32) -> (i32, i32) {
    %c0_i32 = arith.constant 0 : i32
    %c0_i32_0 = arith.constant 0 : i32
    return %arg0, %c0_i32 : i32, i32
  }
}

</mosaic_0001>

<llo_original>
// kernel: tpu_custom_call.1
$region0: #{tpu_custom_call.1}
  #allocation0 [shape = 'u32[]', space=smem, size = 0x4, offset = 0x4, fixed_abs, tag = 'smem constant byte address 0x4 - core index']
  #allocation1 [shape = 'u32[72,128]{1,0:T(1,128)}', space=vmem, size = 0x9000, scoped, tag = 'internal scratch']
  #allocation2 [shape = 'f32[2,128]{1,0:T(2,128)}', space=vmem, size = 0x400, scoped, tag = 'scratch operand']
  %s0 = inlined_call_operand.hbm [shape: f32[2,16,128], index: 0, kind: input, shape index: {}]
  %s1 = inlined_call_operand.hbm [shape: bf16[2,128], index: 1, kind: output, shape index: {}]
  %s2 = sld [smem:[#allocation0]]
  $region26: #{tpu_custom_call.1} parent=0
    _
  %s4 = ssub.s32 1, %s2
  %s5 = scalar_select 0, %s4, %s2
  $region1: #{tpu_custom_call.1} parent=0
    #allocation3 [shape = 'u8[16384]{0}', space=vmem, size = 0x4000, scoped, tag = 'input window, operand 0, single buffered']
    #allocation4 [shape = 's32[1]{0}', space=sflag, size = 0x4, scoped, tag = 'scoped memory for tpu_custom_call.1']
    #allocation5 [shape = 's32[1]{0}', space=sflag, size = 0x4, scoped, tag = 'scoped memory for tpu_custom_call.1']
    #allocation6 [shape = 'u8[512]{0}', space=vmem, size = 0x400, scoped, tag = 'output window, operand 0, single buffered']
    %6 = vsyncpa [#allocation4], 0
    %7 = vsyncpa [#allocation5], 0
    // Predicated region
    $region2: #{tpu_custom_call.1} parent=1 // pred_check
      _
    $region3: #{tpu_custom_call.1} parent=1 // pred_check_branch
      %9 = sbr.rel (0) target = $region5
    $region4: #{tpu_custom_call.1} parent=1 // pred_region
      %11 = vsyncadd [#allocation4], 0
      %s12 = sshll.u32 %s0, 4
      %s13 = int_to_ptr.hbm [resolvable:$true] %s12
      %s14 = sshll.u32 [#allocation3], 4
      %s15 = int_to_ptr.vmem [resolvable:$true] %s14
      %20 = dma.hbm_to_vmem [thread:$0]  %s13, 512, %s15, [#allocation4], 128, 128, 8
    $region5: #{tpu_custom_call.1} parent=1 // pred_fallthru
      _
    // Predicated region
    $region6: #{tpu_custom_call.1} parent=1 // pred_check
      _
    $region7: #{tpu_custom_call.1} parent=1 // pred_check_branch
      %22 = sbr.rel (0) target = $region9
    $region8: #{tpu_custom_call.1} parent=1 // pred_region
      %24 = dma.done [#allocation4], 512
    $region9: #{tpu_custom_call.1} parent=1 // pred_fallthru
      _
    %p25 = scmp.eq.s32.totalorder 0, 0
    // Predicated region
    $region10: #{tpu_custom_call.1} parent=1 // pred_check
      %p26 = pneg %p25
    $region11: #{tpu_custom_call.1} parent=1 // pred_check_branch
      %28 = sbr.rel (%p26) target = $region13
    $region12: #{tpu_custom_call.1} parent=1 // pred_region
      %29 = vst [vmem:[#allocation2] sm:$0x3] 0.0
    $region13: #{tpu_custom_call.1} parent=1 // pred_fallthru
      _
    %v30 = vld [vmem:[#allocation2] sm:$0x3]
    %v31 = vld [vmem:[#allocation3] sm:$0xff]
    %v32 = vld [vmem:[#allocation3 + $0x8] sm:$0xff]
    %v33 = vld [vmem:[#allocation3 + $0x10] sm:$0xff]
    %v34 = vld [vmem:[#allocation3 + $0x18] sm:$0xff]
    %v35 = vadd.f32 %v31, %v32
    %v36 = vrot.slane %v35, 4
    %v37 = vadd.f32 %v35, %v36
    %v38 = vrot.slane %v37, 2
    %v39 = vadd.f32 %v37, %v38
    %v40 = vrot.slane %v39, 1
    %v41 = vadd.f32 %v39, %v40
    %v42 = vadd.f32 %v33, %v34
    %v43 = vrot.slane %v42, 4
    %v44 = vadd.f32 %v42, %v43
    %v45 = vrot.slane %v44, 2
    %v46 = vadd.f32 %v44, %v45
    %v47 = vrot.slane %v46, 1
    %v48 = vadd.f32 %v46, %v47
    %vm51 = vcmask 1041409
    %v52 = vsel %vm51, %v48, %v41
    %v54 = vadd.f32 %v30, %v52
    %55 = vst [vmem:[#allocation2] sm:$0x3] %v54
    // Predicated region
    $region14: #{tpu_custom_call.1} parent=1 // pred_check
      %p56 = pneg %p25
    $region15: #{tpu_custom_call.1} parent=1 // pred_check_branch
      %58 = sbr.rel (%p56) target = $region17
    $region16: #{tpu_custom_call.1} parent=1 // pred_region
      %v59 = vld [vmem:[#allocation2] sm:$0x3]
      %v60 = vmul.f32 %v59, 0.0625
      %v61 = vpack.c.bf16 %v60, %v60
      %62 = vst [vmem:[#allocation6] sm:$0x1] %v61
    $region17: #{tpu_custom_call.1} parent=1 // pred_fallthru
      _
    // Predicated region
    $region18: #{tpu_custom_call.1} parent=1 // pred_check
      _
    $region19: #{tpu_custom_call.1} parent=1 // pred_check_branch
      %64 = sbr.rel (0) target = $region21
    $region20: #{tpu_custom_call.1} parent=1 // pred_region
      %66 = vsyncadd [#allocation5], 0
      %s68 = sshll.u32 [#allocation6], 4
      %s69 = int_to_ptr.vmem [resolvable:$true] %s68
      %s70 = sshll.u32 %s1, 4
      %s71 = int_to_ptr.hbm [resolvable:$true] %s70
      %73 = dma.vmem_to_hbm [thread:$0]  %s69, 16, %s71, [#allocation5]
    $region21: #{tpu_custom_call.1} parent=1 // pred_fallthru
      _
    // Predicated region
    $region22: #{tpu_custom_call.1} parent=1 // pred_check
      _
    $region23: #{tpu_custom_call.1} parent=1 // pred_check_branch
      %75 = sbr.rel (0) target = $region25
    $region24: #{tpu_custom_call.1} parent=1 // pred_region
      %77 = dma.done [#allocation5], 16
    $region25: #{tpu_custom_call.1} parent=1 // pred_fallthru
      _
    %78 = vsyncpa [#allocation4], 1
    %79 = vsyncpa [#allocation5], 1

</llo_original>
